<compile_context>
chip_gen: v6e
topology: v6e:2x2x1
jax: 0.10.0
libtpu: 0.0.40
codegen_flags: <defaults>
</compile_context>

<pallas_src>
import jax
import jax.numpy as jnp
from jax.experimental import pallas as pl
from jax.experimental.pallas import tpu as pltpu


# ---------------------------------------------------------------------------
# Path A (preferred): lane-dense flat output, lane-major dist input.
# ---------------------------------------------------------------------------
def _make_flat_kernel(coeff: float, tile_n: int, g: int):
    def kernel(dist_ref, offset_ref, out_ref):
        d_row = dist_ref[...]                     # (1, tile_n) f32, dense lanes
        off = offset_ref[...]                     # (1, g) f32, loop-invariant
        # lane -> sublane relayout; relayout/XLU has slack in this kernel.
        d_col = d_row.reshape(tile_n, 1)          # (tile_n, 1)
        diff = d_col - off                        # (tile_n, g)
        vals = jnp.exp(coeff * (diff * diff))     # (tile_n, g) f32
        # Row-major flatten -> fully lane-dense store; writeback DMA becomes one
        # contiguous tile_n*g*4-byte transfer (no masked 200-byte rows).
        out_ref[...] = vals.reshape(tile_n * g)
    return kernel


def _clamp_tile_flat(n: int, tile_n: int) -> int:
    """tile_n multiple of 128 (lane-dense blocks); grid >= 2 when possible."""
    if n <= 128:
        return n                     # single full block (full dims are legal)
    half = (pl.cdiv(n, 2) // 128) * 128
    t = min(tile_n, max(128, half))
    return max(128, (t // 128) * 128)


def _gaussian_smearing_flat(dist_flat, offset, coeff, *, tile_n):
    n = dist_flat.shape[0]
    g = offset.shape[0]
    tile_n = _clamp_tile_flat(n, tile_n)
    grid = pl.cdiv(n, tile_n)

    dist_row = dist_flat.reshape(1, n)                    # lane-major input
    offset2d = offset.reshape(1, g)

    cost = pl.CostEstimate(
        flops=3 * n * g,            # sub, mul, mul per output element
        transcendentals=n * g,      # one exp per output element
        bytes_accessed=4 * n + 4 * g + 4 * n * g,
    )

    out_flat = pl.pallas_call(
        _make_flat_kernel(float(coeff), tile_n, g),
        out_shape=jax.ShapeDtypeStruct((n * g,), jnp.float32),
        grid=(grid,),
        in_specs=[
            pl.BlockSpec((1, tile_n), lambda i: (0, i)),   # dense dist chunk
            pl.BlockSpec((1, g), lambda i: (0, 0)),        # loop-invariant
        ],
        out_specs=pl.BlockSpec((tile_n * g,), lambda i: (i,)),
        compiler_params=pltpu.CompilerParams(
            dimension_semantics=("parallel",),
            vmem_limit_bytes=32 * 1024 * 1024),
        cost_estimate=cost,
    )(dist_row, offset2d)

    # Row-major flat -> (n, g): metadata-only reshape, no extra HBM pass.
    return out_flat.reshape(n, g)


# ---------------------------------------------------------------------------
# Path B (fallback): previous known-good kernel with masked 50-lane stores.
# Used only if this Mosaic build cannot lower the in-kernel relayouts above.
# ---------------------------------------------------------------------------
def _make_masked_kernel(coeff: float):
    def kernel(dist_ref, offset_ref, out_ref):
        d = dist_ref[...]          # (tile_n, 1) f32
        off = offset_ref[...]      # (1, g) f32
        diff = d - off             # (tile_n, g)
        out_ref[...] = jnp.exp(coeff * (diff * diff))
    return kernel


def _gaussian_smearing_masked(dist_flat, offset, coeff, *, tile_n):
    n = dist_flat.shape[0]
    g = offset.shape[0]
    if n <= tile_n:
        tile_n = n
    else:
        tile_n = max(8, (tile_n // 8) * 8)
    grid = pl.cdiv(n, tile_n)

    dist2d = dist_flat.reshape(n, 1)
    offset2d = offset.reshape(1, g)

    cost = pl.CostEstimate(
        flops=3 * n * g, transcendentals=n * g,
        bytes_accessed=4 * n + 4 * g + 4 * n * g)

    return pl.pallas_call(
        _make_masked_kernel(float(coeff)),
        out_shape=jax.ShapeDtypeStruct((n, g), jnp.float32),
        grid=(grid,),
        in_specs=[pl.BlockSpec((tile_n, 1), lambda i: (i, 0)),
                  pl.BlockSpec((1, g), lambda i: (0, 0))],
        out_specs=pl.BlockSpec((tile_n, g), lambda i: (i, 0)),
        compiler_params=pltpu.CompilerParams(
            dimension_semantics=("parallel",),
            vmem_limit_bytes=32 * 1024 * 1024),
        cost_estimate=cost,
    )(dist2d, offset2d)


# ---------------------------------------------------------------------------
# Public wrapper (matches GaussianSmearing.forward semantics).
# ---------------------------------------------------------------------------
_FLAT_PATH_OK = None  # None = not probed yet, True/False afterwards


def gaussian_smearing(dist, offset, coeff, *, tile_n=8192):
    """Returns exp(coeff * (dist.reshape(-1,1) - offset.reshape(1,-1))**2) f32."""
    global _FLAT_PATH_OK
    dist_flat = jnp.reshape(dist, (-1,)).astype(jnp.float32)
    offset = offset.astype(jnp.float32)
    n = dist_flat.shape[0]
    g = offset.shape[0]

    if n == 0:                                   # empty input edge case
        return jnp.zeros((0, g), jnp.float32)

    if _FLAT_PATH_OK:
        return _gaussian_smearing_flat(dist_flat, offset, coeff, tile_n=tile_n)

    if _FLAT_PATH_OK is None:
        try:
            out = jax.block_until_ready(
                _gaussian_smearing_flat(dist_flat, offset, coeff, tile_n=tile_n))
            _FLAT_PATH_OK = True
            return out
        except Exception:
            # In-kernel (tile_n, 50)->flat / (1, tile_n)->(tile_n, 1) relayout
            # not supported by this Mosaic build; use the masked-store kernel.
            _FLAT_PATH_OK = False

    return _gaussian_smearing_masked(dist_flat, offset, coeff,
                                     tile_n=min(tile_n, 4096))


class GaussianSmearingJAX:
    """Mirror of the PyTorch module's __init__ (deterministic buffers)."""

    def __init__(self, start=0.0, stop=5.0, num_gaussians=50):
        self.offset = jnp.linspace(start, stop, num_gaussians, dtype=jnp.float32)
        step = float(self.offset[1] - self.offset[0])
        self.coeff = -0.5 / step ** 2

    def __call__(self, dist, *, tile_n=8192):
        return gaussian_smearing(dist, self.offset, self.coeff, tile_n=tile_n)


if __name__ == "__main__":
    root = jax.random.PRNGKey(0)
    k1, k2 = jax.random.split(root)

    module = GaussianSmearingJAX(start=0.0, stop=5.0, num_gaussians=50)

    def reference(d_in):
        d = d_in.reshape(-1, 1) - module.offset.reshape(1, -1)
        return jnp.exp(module.coeff * d * d).astype(jnp.float32)

    # Case 1: N = 128 (single full block).
    dist1 = jax.random.uniform(k1, (8, 16), minval=0.0, maxval=5.0,
                               dtype=jnp.float32)
    out1 = jax.block_until_ready(module(dist1))
    ref1 = reference(dist1)
    assert out1.shape == (dist1.size, 50), out1.shape
    assert out1.dtype == jnp.float32
    assert jnp.max(jnp.abs(out1 - ref1)) < 1e-5

    # Case 2: ragged N = 259 -> multi-block grid with a masked final block.
    dist2 = jax.random.uniform(k2, (7, 37), minval=0.0, maxval=5.0,
                               dtype=jnp.float32)
    out2 = jax.block_until_ready(module(dist2))
    ref2 = reference(dist2)
    assert out2.shape == (dist2.size, 50), out2.shape
    assert out2.dtype == jnp.float32
    assert jnp.max(jnp.abs(out2 - ref2)) < 1e-5

    # Case 3: exercise the masked fallback kernel explicitly (small tile,
    # ragged N) so both code paths are validated regardless of which one the
    # wrapper selected above.
    d2_flat = jnp.reshape(dist2, (-1,)).astype(jnp.float32)
    out3 = jax.block_until_ready(
        _gaussian_smearing_masked(d2_flat, module.offset, module.coeff,
                                  tile_n=64))
    assert out3.shape == (dist2.size, 50), out3.shape
    assert jnp.max(jnp.abs(out3 - ref2)) < 1e-5

    print("KERNEL_OK")
</pallas_src>

<mosaic_0001>
module attributes {stable_mosaic.version = 11 : i64} {
  func.func @kernel(%arg0: i32, %arg1: memref<128x1xf32, #tpu.memory_space<vmem>>, %arg2: memref<1x50xf32, #tpu.memory_space<vmem>>, %arg3: memref<128x50xf32, #tpu.memory_space<vmem>>) attributes {dimension_semantics = [#tpu.dimension_semantics<parallel>], iteration_bounds = array<i64: 1>, scalar_prefetch = 0 : i64, scratch_operands = 0 : i64, tpu.core_type = #tpu.core_type<tc>, window_params = [{transform_indices = @transform_0, window_bounds = array<i64: 128, 1>}, {pipeline_mode = #tpu.pipeline_mode<synchronous>, transform_indices = @transform_1, window_bounds = array<i64: 1, 50>}, {transform_indices = @transform_2, window_bounds = array<i64: 128, 50>}]} {
    %c0 = arith.constant 0 : index
    %c0_0 = arith.constant 0 : index
    %0 = vector.load %arg1[%c0, %c0_0] : memref<128x1xf32, #tpu.memory_space<vmem>>, vector<128x1xf32>
    %c0_1 = arith.constant 0 : index
    %c0_2 = arith.constant 0 : index
    %1 = vector.load %arg2[%c0_1, %c0_2] : memref<1x50xf32, #tpu.memory_space<vmem>>, vector<1x50xf32>
    %2 = vector.broadcast %0 : vector<128x1xf32> to vector<128x50xf32>
    %3 = vector.broadcast %1 : vector<1x50xf32> to vector<128x50xf32>
    %4 = arith.subf %2, %3 : vector<128x50xf32>
    %5 = arith.mulf %4, %4 : vector<128x50xf32>
    %cst = arith.constant -48.0200043 : f32
    %6 = vector.broadcast %cst : f32 to vector<128x50xf32>
    %7 = arith.mulf %6, %5 : vector<128x50xf32>
    %8 = math.exp %7 : vector<128x50xf32>
    %c0_3 = arith.constant 0 : index
    %c0_4 = arith.constant 0 : index
    %9 = vector.load %arg3[%c0_3, %c0_4] : memref<128x50xf32, #tpu.memory_space<vmem>>, vector<128x50xf32>
    tpu.vector_store %arg3[%c0_3, %c0_4], %8 {strides = array<i32>} : memref<128x50xf32, #tpu.memory_space<vmem>>, vector<128x50xf32>,
    return
  }
  func.func @transform_0(%arg0: i32) -> (i32, i32) {
    %c0_i32 = arith.constant 0 : i32
    %c0_i32_0 = arith.constant 0 : i32
    return %arg0, %c0_i32 : i32, i32
  }
  func.func @transform_1(%arg0: i32) -> (i32, i32) {
    %c0_i32 = arith.constant 0 : i32
    %c0_i32_0 = arith.constant 0 : i32
    %c0_i32_1 = arith.constant 0 : i32
    return %c0_i32, %c0_i32_0 : i32, i32
  }
  func.func @transform_2(%arg0: i32) -> (i32, i32) {
    %c0_i32 = arith.constant 0 : i32
    %c0_i32_0 = arith.constant 0 : i32
    return %arg0, %c0_i32 : i32, i32
  }
}

</mosaic_0001>

<llo_original>
// kernel: tpu_custom_call.1
$region0: #{tpu_custom_call.1}
  #allocation0 [shape = 'u32[]', space=smem, size = 0x4, offset = 0x4, fixed_abs, tag = 'smem constant byte address 0x4 - core index']
  #allocation1 [shape = 'u32[144,128]{1,0:T(1,128)}', space=vmem, size = 0x12000, scoped, tag = 'internal scratch']
  %s0 = inlined_call_operand.vmem [shape: f32[128,1], index: 0, kind: input, shape index: {}]
  %s1 = inlined_call_operand.vmem [shape: f32[1,50], index: 1, kind: input, shape index: {}]
  %s2 = inlined_call_operand.vmem [shape: f32[128,50], index: 2, kind: output, shape index: {}]
  %s3 = sld [smem:[#allocation0]]
  $region18: #{tpu_custom_call.1} parent=0
    _
  %s5 = ssub.s32 1, %s3
  %s6 = scalar_select 0, %s5, %s3
  // Predicated region
  $region2: #{tpu_custom_call.1} parent=0 // pred_check
    _
  $region3: #{tpu_custom_call.1} parent=0 // pred_check_branch
    %8 = sbr.rel (0) target = $region5
  $region4: #{tpu_custom_call.1} parent=0 // pred_region
    _
  $region5: #{tpu_custom_call.1} parent=0 // pred_fallthru
    _
  // Predicated region
  $region6: #{tpu_custom_call.1} parent=0 // pred_check
    _
  $region7: #{tpu_custom_call.1} parent=0 // pred_check_branch
    %10 = sbr.rel (0) target = $region9
  $region8: #{tpu_custom_call.1} parent=0 // pred_region
    _
  $region9: #{tpu_custom_call.1} parent=0 // pred_fallthru
    _
  %v11 = vld [vmem:[%s0] sm:$0xff]
  %v12 = vld [vmem:[%s0 + $0x8] sm:$0xff]
  %v13 = vld [vmem:[%s0 + $0x10] sm:$0xff]
  %v14 = vld [vmem:[%s0 + $0x18] sm:$0xff]
  %v15 = vld [vmem:[%s0 + $0x20] sm:$0xff]
  %v16 = vld [vmem:[%s0 + $0x28] sm:$0xff]
  %v17 = vld [vmem:[%s0 + $0x30] sm:$0xff]
  %v18 = vld [vmem:[%s0 + $0x38] sm:$0xff]
  %v19 = vld [vmem:[%s0 + $0x40] sm:$0xff]
  %v20 = vld [vmem:[%s0 + $0x48] sm:$0xff]
  %v21 = vld [vmem:[%s0 + $0x50] sm:$0xff]
  %v22 = vld [vmem:[%s0 + $0x58] sm:$0xff]
  %v23 = vld [vmem:[%s0 + $0x60] sm:$0xff]
  %v24 = vld [vmem:[%s0 + $0x68] sm:$0xff]
  %v25 = vld [vmem:[%s0 + $0x70] sm:$0xff]
  %v26 = vld [vmem:[%s0 + $0x78] sm:$0xff]
  %v27 = vld [vmem:[%s1] sm:$0x1]
  %29 = vset.pattern.permute.xlu0 0
  %30 = vperm.xlu0 %29, %v11
  %v31 = vpop.permute.xlu0 %30
  %34 = vset.pattern.permute.xlu0 0
  %35 = vperm.xlu0 %34, %v12
  %v36 = vpop.permute.xlu0 %35
  %39 = vset.pattern.permute.xlu0 0
  %40 = vperm.xlu0 %39, %v13
  %v41 = vpop.permute.xlu0 %40
  %44 = vset.pattern.permute.xlu0 0
  %45 = vperm.xlu0 %44, %v14
  %v46 = vpop.permute.xlu0 %45
  %49 = vset.pattern.permute.xlu0 0
  %50 = vperm.xlu0 %49, %v15
  %v51 = vpop.permute.xlu0 %50
  %54 = vset.pattern.permute.xlu0 0
  %55 = vperm.xlu0 %54, %v16
  %v56 = vpop.permute.xlu0 %55
  %59 = vset.pattern.permute.xlu0 0
  %60 = vperm.xlu0 %59, %v17
  %v61 = vpop.permute.xlu0 %60
  %64 = vset.pattern.permute.xlu0 0
  %65 = vperm.xlu0 %64, %v18
  %v66 = vpop.permute.xlu0 %65
  %69 = vset.pattern.permute.xlu0 0
  %70 = vperm.xlu0 %69, %v19
  %v71 = vpop.permute.xlu0 %70
  %74 = vset.pattern.permute.xlu0 0
  %75 = vperm.xlu0 %74, %v20
  %v76 = vpop.permute.xlu0 %75
  %79 = vset.pattern.permute.xlu0 0
  %80 = vperm.xlu0 %79, %v21
  %v81 = vpop.permute.xlu0 %80
  %84 = vset.pattern.permute.xlu0 0
  %85 = vperm.xlu0 %84, %v22
  %v86 = vpop.permute.xlu0 %85
  %89 = vset.pattern.permute.xlu0 0
  %90 = vperm.xlu0 %89, %v23
  %v91 = vpop.permute.xlu0 %90
  %94 = vset.pattern.permute.xlu0 0
  %95 = vperm.xlu0 %94, %v24
  %v96 = vpop.permute.xlu0 %95
  %99 = vset.pattern.permute.xlu0 0
  %100 = vperm.xlu0 %99, %v25
  %v101 = vpop.permute.xlu0 %100
  %104 = vset.pattern.permute.xlu0 0
  %105 = vperm.xlu0 %104, %v26
  %v106 = vpop.permute.xlu0 %105
  %v109 = vlaneseq
  %v110 = vshrl.u32 %v109, 7
  %v111 = vsub.s32 0, %v110
  %v112 = vrot.slane %v27, %v111
  %v114 = vsub.f32 %v31, %v112
  %v115 = vsub.f32 %v36, %v112
  %v116 = vsub.f32 %v41, %v112
  %v117 = vsub.f32 %v46, %v112
  %v118 = vsub.f32 %v51, %v112
  %v119 = vsub.f32 %v56, %v112
  %v120 = vsub.f32 %v61, %v112
  %v121 = vsub.f32 %v66, %v112
  %v122 = vsub.f32 %v71, %v112
  %v123 = vsub.f32 %v76, %v112
  %v124 = vsub.f32 %v81, %v112
  %v125 = vsub.f32 %v86, %v112
  %v126 = vsub.f32 %v91, %v112
  %v127 = vsub.f32 %v96, %v112
  %v128 = vsub.f32 %v101, %v112
  %v129 = vsub.f32 %v106, %v112
  %v130 = vmul.f32 %v114, %v114
  %v131 = vmul.f32 %v115, %v115
  %v132 = vmul.f32 %v116, %v116
  %v133 = vmul.f32 %v117, %v117
  %v134 = vmul.f32 %v118, %v118
  %v135 = vmul.f32 %v119, %v119
  %v136 = vmul.f32 %v120, %v120
  %v137 = vmul.f32 %v121, %v121
  %v138 = vmul.f32 %v122, %v122
  %v139 = vmul.f32 %v123, %v123
  %v140 = vmul.f32 %v124, %v124
  %v141 = vmul.f32 %v125, %v125
  %v142 = vmul.f32 %v126, %v126
  %v143 = vmul.f32 %v127, %v127
  %v144 = vmul.f32 %v128, %v128
  %v145 = vmul.f32 %v129, %v129
  %v146 = vmul.f32 %v130, -48.020004
  %v147 = vmul.f32 %v131, -48.020004
  %v148 = vmul.f32 %v132, -48.020004
  %v149 = vmul.f32 %v133, -48.020004
  %v150 = vmul.f32 %v134, -48.020004
  %v151 = vmul.f32 %v135, -48.020004
  %v152 = vmul.f32 %v136, -48.020004
  %v153 = vmul.f32 %v137, -48.020004
  %v154 = vmul.f32 %v138, -48.020004
  %v155 = vmul.f32 %v139, -48.020004
  %v156 = vmul.f32 %v140, -48.020004
  %v157 = vmul.f32 %v141, -48.020004
  %v158 = vmul.f32 %v142, -48.020004
  %v159 = vmul.f32 %v143, -48.020004
  %v160 = vmul.f32 %v144, -48.020004
  %v161 = vmul.f32 %v145, -48.020004
  %v162 = vmul.f32 %v146, 1.442695
  %v163 = vpow.pop %v162
  %v164 = vmul.f32 %v147, 1.442695
  %v165 = vpow.pop %v164
  %v166 = vmul.f32 %v148, 1.442695
  %v167 = vpow.pop %v166
  %v168 = vmul.f32 %v149, 1.442695
  %v169 = vpow.pop %v168
  %v170 = vmul.f32 %v150, 1.442695
  %v171 = vpow.pop %v170
  %v172 = vmul.f32 %v151, 1.442695
  %v173 = vpow.pop %v172
  %v174 = vmul.f32 %v152, 1.442695
  %v175 = vpow.pop %v174
  %v176 = vmul.f32 %v153, 1.442695
  %v177 = vpow.pop %v176
  %v178 = vmul.f32 %v154, 1.442695
  %v179 = vpow.pop %v178
  %v180 = vmul.f32 %v155, 1.442695
  %v181 = vpow.pop %v180
  %v182 = vmul.f32 %v156, 1.442695
  %v183 = vpow.pop %v182
  %v184 = vmul.f32 %v157, 1.442695
  %v185 = vpow.pop %v184
  %v186 = vmul.f32 %v158, 1.442695
  %v187 = vpow.pop %v186
  %v188 = vmul.f32 %v159, 1.442695
  %v189 = vpow.pop %v188
  %v190 = vmul.f32 %v160, 1.442695
  %v191 = vpow.pop %v190
  %v192 = vmul.f32 %v161, 1.442695
  %v193 = vpow.pop %v192
  %vm194 = vcmask 408576
  %195 = vst.msk [vmem:[%s2] sm:$0xff] %vm194, %v163
  %196 = vst.msk [vmem:[%s2 + $0x8] sm:$0xff] %vm194, %v165
  %197 = vst.msk [vmem:[%s2 + $0x10] sm:$0xff] %vm194, %v167
  %198 = vst.msk [vmem:[%s2 + $0x18] sm:$0xff] %vm194, %v169
  %199 = vst.msk [vmem:[%s2 + $0x20] sm:$0xff] %vm194, %v171
  %200 = vst.msk [vmem:[%s2 + $0x28] sm:$0xff] %vm194, %v173
  %201 = vst.msk [vmem:[%s2 + $0x30] sm:$0xff] %vm194, %v175
  %202 = vst.msk [vmem:[%s2 + $0x38] sm:$0xff] %vm194, %v177
  %203 = vst.msk [vmem:[%s2 + $0x40] sm:$0xff] %vm194, %v179
  %204 = vst.msk [vmem:[%s2 + $0x48] sm:$0xff] %vm194, %v181
  %205 = vst.msk [vmem:[%s2 + $0x50] sm:$0xff] %vm194, %v183
  %206 = vst.msk [vmem:[%s2 + $0x58] sm:$0xff] %vm194, %v185
  %207 = vst.msk [vmem:[%s2 + $0x60] sm:$0xff] %vm194, %v187
  %208 = vst.msk [vmem:[%s2 + $0x68] sm:$0xff] %vm194, %v189
  %209 = vst.msk [vmem:[%s2 + $0x70] sm:$0xff] %vm194, %v191
  %210 = vst.msk [vmem:[%s2 + $0x78] sm:$0xff] %vm194, %v193
  // Predicated region
  $region10: #{tpu_custom_call.1} parent=0 // pred_check
    _
  $region11: #{tpu_custom_call.1} parent=0 // pred_check_branch
    %212 = sbr.rel (0) target = $region13
  $region12: #{tpu_custom_call.1} parent=0 // pred_region
    _
  $region13: #{tpu_custom_call.1} parent=0 // pred_fallthru
    _
  // Predicated region
  $region14: #{tpu_custom_call.1} parent=0 // pred_check
    _
  $region15: #{tpu_custom_call.1} parent=0 // pred_check_branch
    %214 = sbr.rel (0) target = $region17
  $region16: #{tpu_custom_call.1} parent=0 // pred_region
    _
  $region17: #{tpu_custom_call.1} parent=0 // pred_fallthru
    _

</llo_original>
